<compile_context>
chip_gen: v7x
topology: tpu7x:2x2x1
jax: 0.10.0
libtpu: 0.0.40
codegen_flags: <defaults>
</compile_context>

<pallas_src>
import functools

import jax
import jax.numpy as jnp
from jax.experimental import pallas as pl
from jax.experimental.pallas import tpu as pltpu

EPS = 1e-5


def _round_up(x, m):
    return (x + m - 1) // m * m


# --------------------------------------------------------------------------- #
# Kernel 1: conv (im2col matmul) + per-tile channel sum / sum-of-squares
# --------------------------------------------------------------------------- #
def conv_stats_kernel(p_ref, w_ref, y_ref, stats_ref):
    """
    p_ref     : (TM, K_pad)      im2col patches tile (zero-padded rows/cols)
    w_ref     : (K_pad, C_pad)   weight matrix (zero-padded)
    y_ref     : (TM, C_pad)      f32 conv output tile (lane-dense, 128-mult lanes)
    stats_ref : (1, 2, C_pad)    per-tile [sum, sum_sq] over rows
    """
    acc = jnp.dot(p_ref[...], w_ref[...], preferred_element_type=jnp.float32)
    y_ref[...] = acc
    s = jnp.sum(acc, axis=0, keepdims=True)            # (1, C_pad)
    sq = jnp.sum(acc * acc, axis=0, keepdims=True)     # (1, C_pad)
    stats_ref[...] = jnp.concatenate([s, sq], axis=0).reshape(1, 2, -1)


# --------------------------------------------------------------------------- #
# Kernel 2: BatchNorm finalize (folded scale/shift) + ReLU, per row tile
# --------------------------------------------------------------------------- #
def bn_relu_kernel(y_ref, stats_ref, gb_ref, o_ref, *, inv_count):
    """
    y_ref     : (TM, C_pad)          f32 conv output tile
    stats_ref : (n_tiles, 2, C_pad)  all per-tile partial stats (small, resident)
    gb_ref    : (2, C_pad)           packed [gamma; beta]
    o_ref     : (TM, C_pad)          output tile (lane-dense)
    """
    # Tiny per-channel finalize; recomputed per tile but hidden under the
    # HBM-bound read/write of the (TM, C_pad) activation tile.
    totals = jnp.sum(stats_ref[...], axis=0)            # (2, C_pad)
    mean = totals[0:1, :] * inv_count                    # E[x]
    var = totals[1:2, :] * inv_count - mean * mean       # E[x^2] - E[x]^2 (biased)
    scale = gb_ref[0:1, :] * jax.lax.rsqrt(var + EPS)    # gamma * inv_std  (EUP)
    shift = gb_ref[1:2, :] - mean * scale                # beta - mean*scale
    y = y_ref[...] * scale + shift                       # single FMA-style pass
    o_ref[...] = jnp.maximum(y, 0.0).astype(o_ref.dtype)


# --------------------------------------------------------------------------- #
# Wrapper: NCHW in, NCHW out (matches PyTorch SameBlock2d.forward, train mode)
# --------------------------------------------------------------------------- #
def same_block2d(x_nchw, w_oihw, bias, gamma, beta, padding=1, tile_m=256):
    N, Cin, H, W = x_nchw.shape
    Cout, _, KH, KW = w_oihw.shape
    out_dtype = x_nchw.dtype

    # NOTE: the conv bias is mathematically cancelled by training-mode BatchNorm's
    # mean subtraction, so it is not used in the kernels (results identical up to
    # float rounding). Kept in the signature for API parity with the module.
    del bias

    # ---- layout glue (plain JAX): NCHW -> NHWC, zero pad, im2col --------------
    x = jnp.transpose(x_nchw, (0, 2, 3, 1)).astype(jnp.float32)      # NHWC
    x = jnp.pad(x, ((0, 0), (padding, padding), (padding, padding), (0, 0)))
    taps = [x[:, kh:kh + H, kw:kw + W, :] for kh in range(KH) for kw in range(KW)]
    patches = jnp.concatenate(taps, axis=-1).reshape(N * H * W, KH * KW * Cin)

    # weight: (Cout, Cin, KH, KW) -> (KH, KW, Cin, Cout) -> (KH*KW*Cin, Cout)
    wmat = jnp.transpose(w_oihw, (2, 3, 1, 0)).reshape(KH * KW * Cin, Cout)
    wmat = wmat.astype(jnp.float32)

    # ---- padding to MXU/lane-friendly sizes -----------------------------------
    M = N * H * W
    K = KH * KW * Cin
    K_pad = _round_up(K, 128)          # contraction padded toward 128 (v5e-friendly)
    C_pad = _round_up(Cout, 128)       # lane-dense output channels
    tm = min(tile_m, max(8, _round_up(M, 8)))
    M_pad = _round_up(M, tm)
    n_tiles = M_pad // tm

    patches = jnp.pad(patches, ((0, M_pad - M), (0, K_pad - K)))
    wmat = jnp.pad(wmat, ((0, K_pad - K), (0, C_pad - Cout)))
    gb = jnp.stack([gamma.astype(jnp.float32), beta.astype(jnp.float32)])
    gb = jnp.pad(gb, ((0, 0), (0, C_pad - Cout)))                     # (2, C_pad)

    # ---- kernel 1: conv matmul + per-tile partial stats ------------------------
    y, stats = pl.pallas_call(
        conv_stats_kernel,
        out_shape=(
            jax.ShapeDtypeStruct((M_pad, C_pad), jnp.float32),
            jax.ShapeDtypeStruct((n_tiles, 2, C_pad), jnp.float32),
        ),
        grid_spec=pltpu.PrefetchScalarGridSpec(
            num_scalar_prefetch=0,
            grid=(n_tiles,),
            in_specs=[
                pl.BlockSpec((tm, K_pad), lambda i: (i, 0)),
                pl.BlockSpec((K_pad, C_pad), lambda i: (0, 0)),
            ],
            out_specs=(
                pl.BlockSpec((tm, C_pad), lambda i: (i, 0)),
                pl.BlockSpec((1, 2, C_pad), lambda i: (i, 0, 0)),
            ),
        ),
        compiler_params=pltpu.CompilerParams(dimension_semantics=("parallel",)),
    )(patches, wmat)

    # ---- kernel 2: BN finalize (scale/shift fold) + ReLU ------------------------
    kern2 = functools.partial(bn_relu_kernel, inv_count=1.0 / float(M))
    out = pl.pallas_call(
        kern2,
        out_shape=jax.ShapeDtypeStruct((M_pad, C_pad), out_dtype),
        grid_spec=pltpu.PrefetchScalarGridSpec(
            num_scalar_prefetch=0,
            grid=(n_tiles,),
            in_specs=[
                pl.BlockSpec((tm, C_pad), lambda i: (i, 0)),
                pl.BlockSpec((n_tiles, 2, C_pad), lambda i: (0, 0, 0)),
                pl.BlockSpec((2, C_pad), lambda i: (0, 0)),
            ],
            out_specs=pl.BlockSpec((tm, C_pad), lambda i: (i, 0)),
        ),
        compiler_params=pltpu.CompilerParams(dimension_semantics=("parallel",)),
    )(y, stats, gb)

    # ---- layout glue: drop padding, back to NCHW --------------------------------
    out = out[:M, :Cout].reshape(N, H, W, Cout)
    return jnp.transpose(out, (0, 3, 1, 2))


# --------------------------------------------------------------------------- #
# Pure-JAX reference (mirrors the PyTorch forward in training mode)
# --------------------------------------------------------------------------- #
def reference_forward(x, w_oihw, bias, gamma, beta):
    y = jax.lax.conv_general_dilated(
        x, w_oihw, window_strides=(1, 1), padding=((1, 1), (1, 1)),
        dimension_numbers=("NCHW", "OIHW", "NCHW"))
    y = y + bias.reshape(1, -1, 1, 1)
    mean = jnp.mean(y, axis=(0, 2, 3), keepdims=True)
    var = jnp.mean((y - mean) ** 2, axis=(0, 2, 3), keepdims=True)
    y = (y - mean) * jax.lax.rsqrt(var + EPS)
    y = y * gamma.reshape(1, -1, 1, 1) + beta.reshape(1, -1, 1, 1)
    return jnp.maximum(y, 0.0)


if __name__ == "__main__":
    key = jax.random.PRNGKey(0)
    k_x, k_w, k_b = jax.random.split(key, 3)

    # small shapes consistent with the module: in_features=4, out_features=8
    N, Cin, H, W = 2, 4, 16, 16
    Cout, KH, KW = 8, 3, 3

    x = jax.random.normal(k_x, (N, Cin, H, W), jnp.float32)

    # deterministic synthetic parameters (PyTorch-like uniform fan-in bound)
    bound = 1.0 / (Cin * KH * KW) ** 0.5
    w = jax.random.uniform(k_w, (Cout, Cin, KH, KW), jnp.float32, -bound, bound)
    b = jax.random.uniform(k_b, (Cout,), jnp.float32, -bound, bound)
    gamma = jnp.ones((Cout,), jnp.float32)    # BatchNorm2d default weight
    beta = jnp.zeros((Cout,), jnp.float32)    # BatchNorm2d default bias

    out = jax.block_until_ready(same_block2d(x, w, b, gamma, beta))
    ref = jax.block_until_ready(reference_forward(x, w, b, gamma, beta))

    assert out.shape == (N, Cout, H, W), out.shape
    assert jnp.allclose(out, ref, atol=1e-4, rtol=1e-4), \
        float(jnp.max(jnp.abs(out - ref)))

    print("KERNEL_OK")
</pallas_src>

<mosaic_0001>
module attributes {stable_mosaic.version = 11 : i64} {
  func.func @conv_stats_kernel(%arg0: i32, %arg1: memref<256x128xf32, #tpu.memory_space<vmem>>, %arg2: memref<128x128xf32, #tpu.memory_space<vmem>>, %arg3: memref<256x128xf32, #tpu.memory_space<vmem>>, %arg4: memref<1x2x128xf32, #tpu.memory_space<vmem>>) attributes {dimension_semantics = [#tpu.dimension_semantics<parallel>], iteration_bounds = array<i64: 2>, scalar_prefetch = 0 : i64, scratch_operands = 0 : i64, tpu.core_type = #tpu.core_type<tc>, window_params = [{transform_indices = @transform_0, window_bounds = array<i64: 256, 128>}, {pipeline_mode = #tpu.pipeline_mode<synchronous>, transform_indices = @transform_1, window_bounds = array<i64: 128, 128>}, {transform_indices = @transform_2, window_bounds = array<i64: 256, 128>}, {transform_indices = @transform_3, window_bounds = array<i64: 1, 2, 128>}]} {
    %c0 = arith.constant 0 : index
    %c0_0 = arith.constant 0 : index
    %0 = vector.load %arg1[%c0, %c0_0] : memref<256x128xf32, #tpu.memory_space<vmem>>, vector<256x128xf32>
    %c0_1 = arith.constant 0 : index
    %c0_2 = arith.constant 0 : index
    %1 = vector.load %arg2[%c0_1, %c0_2] : memref<128x128xf32, #tpu.memory_space<vmem>>, vector<128x128xf32>
    %cst = arith.constant dense<0.000000e+00> : vector<256x128xf32>
    %2 = tpu.matmul %0, %1, %cst {dimension_numbers = #tpu.dot_dimension_numbers<[1], [0], [0], [1], [0, 0, 1, 1], [], []>} : vector<256x128xf32>, vector<128x128xf32>, vector<256x128xf32> -> vector<256x128xf32>
    %c0_3 = arith.constant 0 : index
    %c0_4 = arith.constant 0 : index
    %3 = vector.load %arg3[%c0_3, %c0_4] : memref<256x128xf32, #tpu.memory_space<vmem>>, vector<256x128xf32>
    tpu.vector_store %arg3[%c0_3, %c0_4], %2 {strides = array<i32>} : memref<256x128xf32, #tpu.memory_space<vmem>>, vector<256x128xf32>,
    %cst_5 = arith.constant dense<0.000000e+00> : vector<128xf32>
    %4 = vector.multi_reduction <add>, %2, %cst_5 [0] : vector<256x128xf32> to vector<128xf32>
    %5 = vector.shape_cast %4 : vector<128xf32> to vector<1x128xf32>
    %6 = arith.mulf %2, %2 : vector<256x128xf32>
    %cst_6 = arith.constant dense<0.000000e+00> : vector<128xf32>
    %7 = vector.multi_reduction <add>, %6, %cst_6 [0] : vector<256x128xf32> to vector<128xf32>
    %8 = vector.shape_cast %7 : vector<128xf32> to vector<1x128xf32>
    %9 = tpu.concatenate %5, %8 in 0 : vector<1x128xf32>, vector<1x128xf32> -> vector<2x128xf32>
    %10 = vector.shape_cast %9 : vector<2x128xf32> to vector<1x2x128xf32>
    %c0_7 = arith.constant 0 : index
    %c0_8 = arith.constant 0 : index
    %c0_9 = arith.constant 0 : index
    %11 = vector.load %arg4[%c0_7, %c0_8, %c0_9] : memref<1x2x128xf32, #tpu.memory_space<vmem>>, vector<1x2x128xf32>
    tpu.vector_store %arg4[%c0_7, %c0_8, %c0_9], %10 {strides = array<i32>} : memref<1x2x128xf32, #tpu.memory_space<vmem>>, vector<1x2x128xf32>,
    return
  }
  func.func @transform_0(%arg0: i32) -> (i32, i32) {
    %c0_i32 = arith.constant 0 : i32
    %c0_i32_0 = arith.constant 0 : i32
    return %arg0, %c0_i32 : i32, i32
  }
  func.func @transform_1(%arg0: i32) -> (i32, i32) {
    %c0_i32 = arith.constant 0 : i32
    %c0_i32_0 = arith.constant 0 : i32
    %c0_i32_1 = arith.constant 0 : i32
    return %c0_i32, %c0_i32_0 : i32, i32
  }
  func.func @transform_2(%arg0: i32) -> (i32, i32) {
    %c0_i32 = arith.constant 0 : i32
    %c0_i32_0 = arith.constant 0 : i32
    return %arg0, %c0_i32 : i32, i32
  }
  func.func @transform_3(%arg0: i32) -> (i32, i32, i32) {
    %c0_i32 = arith.constant 0 : i32
    %c0_i32_0 = arith.constant 0 : i32
    %c0_i32_1 = arith.constant 0 : i32
    return %arg0, %c0_i32, %c0_i32_0 : i32, i32, i32
  }
}

</mosaic_0001>

<llo_original>
// kernel: tpu_custom_call.1
$region0: #{tpu_custom_call.1}
  #allocation0 [shape = 'u32[]', space=smem, size = 0x4, offset = 0x4, fixed_abs, tag = 'smem constant byte address 0x4 - core index']
  #allocation1 [shape = 'u32[144,128]{1,0:T(1,128)}', space=vmem, size = 0x12000, scoped, tag = 'internal scratch']
  %s0 = inlined_call_operand.hbm [shape: f32[512,128], index: 0, kind: input, shape index: {}]
  %s1 = inlined_call_operand.hbm [shape: f32[128,128], index: 1, kind: input, shape index: {}]
  %s2 = inlined_call_operand.hbm [shape: f32[512,128], index: 2, kind: output, shape index: {0}]
  %s3 = inlined_call_operand.hbm [shape: f32[2,2,128], index: 3, kind: output, shape index: {1}]
  %4 = xla_tuple %s2, %s3
  %s5 = sld [smem:[#allocation0]]
  $region57: #{tpu_custom_call.1} parent=0
    _
  %s7 = ssub.s32 1, %s5
  %s8 = scalar_select 0, %s7, %s5
  $region1: #{tpu_custom_call.1} parent=0
    #allocation2 [shape = 'u8[262144]{0}', space=vmem, size = 0x40000, scoped, tag = 'input window, operand 0']
    #allocation3 [shape = 's32[2]{0}', space=sflag, size = 0x8, scoped, tag = 'scoped memory for tpu_custom_call.1']
    #allocation4 [shape = 's32[2]{0}', space=sflag, size = 0x8, scoped, tag = 'scoped memory for tpu_custom_call.1']
    #allocation5 [shape = 'u8[65536]{0}', space=vmem, size = 0x10000, scoped, tag = 'input window, operand 1, single buffered']
    #allocation6 [shape = 's32[1]{0}', space=sflag, size = 0x4, scoped, tag = 'scoped memory for tpu_custom_call.1']
    #allocation7 [shape = 'u8[262144]{0}', space=vmem, size = 0x40000, scoped, tag = 'output window, operand 0']
    #allocation8 [shape = 'u8[2048]{0}', space=vmem, size = 0x800, scoped, tag = 'output window, operand 1']
    #allocation9 [shape = 's32[2]{0}', space=sflag, size = 0x8, scoped, tag = 'scoped memory for tpu_custom_call.1']
    %9 = vsyncpa [#allocation3], 0
    %s10 = scalar_lea.sflag [#allocation3], 1
    %11 = vsyncpa %s10, 0
    %12 = vsyncpa [#allocation6], 0
    %13 = vsyncpa [#allocation4], 0
    %s14 = scalar_lea.sflag [#allocation4], 1
    %15 = vsyncpa %s14, 0
    %16 = vsyncpa [#allocation9], 0
    %s17 = scalar_lea.sflag [#allocation9], 1
    %18 = vsyncpa %s17, 0
    loop: start=0, step=1, limit=4
    $region2: #{tpu_custom_call.1} parent=1 // loop_pre_header
      _
    $region3: #{tpu_custom_call.1} parent=1 // loop_header
      %s20 = sphi 0, %s24
      %p21 = scmp.ge.s32.totalorder %s20, 4
      %s30 = sphi 0, %s32
      %s33 = sphi 0, %s30
      %s34 = sphi 0, %s33
      %s50 = sphi 0, %s34
      %s54 = sphi 0, %s54
      %s56 = sphi 0, %s54
      %s57 = sphi 0, %s56
      %s71 = sphi 0, %s57
      %s77 = sphi 0, %s79
      %s80 = sphi 0, %s77
      %s81 = sphi 0, %s80
      %s97 = sphi 0, %s81
      %s103 = sphi 0, %s105
      %s106 = sphi 0, %s103
      %s107 = sphi 0, %s106
      %s123 = sphi 0, %s107
    $region4: #{tpu_custom_call.1} parent=1 // loop_header_branch
      %23 = sbr.rel (%p21) target = $region8
    $region5: #{tpu_custom_call.1} parent=1 // loop_body
      %s25 = ssub.s32 %s20, 1
      %s26 = ssub.s32 %s20, 2
      %s27 = sadd.s32 %s20, 1
      %s28 = ssub.s32 %s20, %s27
      %p29 = scmp.eq.s32.totalorder %s28, 0
      %s31 = sadd.s32 %s30, 1
      %s32 = scalar_select %p29, %s30, %s31
      %p35 = pneg %p29
      %p36 = scmp.eq.s32.totalorder %s20, 1
      %p37 = por %p35, %p36
      %p38 = scmp.ne.s32.totalorder %s30, %s33
      %p39 = scmp.eq.s32.totalorder %s20, 0
      %p40 = por %p38, %p39
      %p41 = scmp.ne.s32.totalorder %s30, %s33
      %p42 = scmp.eq.s32.totalorder %s25, 1
      %p43 = por %p41, %p42
      %p44 = scmp.ne.s32.totalorder %s33, %s34
      %p45 = scmp.eq.s32.totalorder %s25, 0
      %p46 = por %p44, %p45
      %p47 = scmp.ne.s32.totalorder %s33, %s34
      %p48 = scmp.eq.s32.totalorder %s26, 1
      %p49 = por %p47, %p48
      %p51 = scmp.ne.s32.totalorder %s34, %s50
      %p52 = scmp.eq.s32.totalorder %s26, 0
      %p53 = por %p51, %p52
      %s55 = sadd.s32 %s54, 1
      %p58 = scmp.eq.s32.totalorder %s20, 1
      %p59 = scmp.ne.s32.totalorder %s54, %s56
      %p60 = scmp.eq.s32.totalorder %s20, 0
      %p61 = por %p59, %p60
      %p62 = scmp.ne.s32.totalorder %s54, %s56
      %p63 = scmp.eq.s32.totalorder %s25, 1
      %p64 = por %p62, %p63
      %p65 = scmp.ne.s32.totalorder %s56, %s57
      %p66 = scmp.eq.s32.totalorder %s25, 0
      %p67 = por %p65, %p66
      %p68 = scmp.ne.s32.totalorder %s56, %s57
      %p69 = scmp.eq.s32.totalorder %s26, 1
      %p70 = por %p68, %p69
      %p72 = scmp.ne.s32.totalorder %s57, %s71
      %p73 = scmp.eq.s32.totalorder %s26, 0
      %p74 = por %p72, %p73
      %s75 = ssub.s32 %s20, %s27
      %p76 = scmp.eq.s32.totalorder %s75, 0
      %s78 = sadd.s32 %s77, 1
      %s79 = scalar_select %p76, %s77, %s78
      %p82 = pneg %p76
      %p83 = scmp.eq.s32.totalorder %s20, 1
      %p84 = por %p82, %p83
      %p85 = scmp.ne.s32.totalorder %s77, %s80
      %p86 = scmp.eq.s32.totalorder %s20, 0
      %p87 = por %p85, %p86
      %p88 = scmp.ne.s32.totalorder %s77, %s80
      %p89 = scmp.eq.s32.totalorder %s25, 1
      %p90 = por %p88, %p89
      %p91 = scmp.ne.s32.totalorder %s80, %s81
      %p92 = scmp.eq.s32.totalorder %s25, 0
      %p93 = por %p91, %p92
      %p94 = scmp.ne.s32.totalorder %s80, %s81
      %p95 = scmp.eq.s32.totalorder %s26, 1
      %p96 = por %p94, %p95
      %p98 = scmp.ne.s32.totalorder %s81, %s97
      %p99 = scmp.eq.s32.totalorder %s26, 0
      %p100 = por %p98, %p99
      %s101 = ssub.s32 %s20, %s27
      %p102 = scmp.eq.s32.totalorder %s101, 0
      %s104 = sadd.s32 %s103, 1
      %s105 = scalar_select %p102, %s103, %s104
      %p108 = pneg %p102
      %p109 = scmp.eq.s32.totalorder %s20, 1
      %p110 = por %p108, %p109
      %p111 = scmp.ne.s32.totalorder %s103, %s106
      %p112 = scmp.eq.s32.totalorder %s20, 0
      %p113 = por %p111, %p112
      %p114 = scmp.ne.s32.totalorder %s103, %s106
      %p115 = scmp.eq.s32.totalorder %s25, 1
      %p116 = por %p114, %p115
      %p117 = scmp.ne.s32.totalorder %s106, %s107
      %p118 = scmp.eq.s32.totalorder %s25, 0
      %p119 = por %p117, %p118
      %p120 = scmp.ne.s32.totalorder %s106, %s107
      %p121 = scmp.eq.s32.totalorder %s26, 1
      %p122 = por %p120, %p121
      %p124 = scmp.ne.s32.totalorder %s107, %s123
      %p125 = scmp.eq.s32.totalorder %s26, 0
      %p126 = por %p124, %p125
      %p127 = scmp.le.s32.totalorder 1, %s20
      %p128 = scmp.lt.s32.totalorder %s20, 3
      %p129 = pnand %p127, %p128
      %p130 = pneg %p129
      // Predicated region
      $region9: #{tpu_custom_call.1} parent=5 // pred_check
        _
      $region10: #{tpu_custom_call.1} parent=5 // pred_check_branch
        %132 = sbr.rel (%p129) target = $region12
      $region11: #{tpu_custom_call.1} parent=5 // pred_region
        %s133 = ssub.s32 %s20, 1
        // Predicated region
        $region13: #{tpu_custom_call.1} parent=11 // pred_check
          %p134 = pneg %p67
        $region14: #{tpu_custom_call.1} parent=11 // pred_check_branch
          %136 = sbr.rel (%p134) target = $region16
        $region15: #{tpu_custom_call.1} parent=11 // pred_region
          %s138 = ssub.s32 2048, 2048
          %139 = vsyncadd [#allocation6], %s138
          %s140 = sshll.u32 [#allocation5], 4
          %s141 = int_to_ptr.vmem [resolvable:$true] %s140
          %146 = dma.hbm_to_vmem [thread:$0]  %s1, 2048, %s141, [#allocation6], 128, 128, 8
        $region16: #{tpu_custom_call.1} parent=11 // pred_fallthru
          _
      $region12: #{tpu_custom_call.1} parent=5 // pred_fallthru
        _
      %p147 = scmp.lt.s32.totalorder %s20, 2
      // Predicated region
      $region17: #{tpu_custom_call.1} parent=5 // pred_check
        %p148 = pneg %p147
      $region18: #{tpu_custom_call.1} parent=5 // pred_check_branch
        %150 = sbr.rel (%p148) target = $region20
      $region19: #{tpu_custom_call.1} parent=5 // pred_region
        // Predicated region
        $region21: #{tpu_custom_call.1} parent=19 // pred_check
          %p151 = pneg %p40
        $region22: #{tpu_custom_call.1} parent=19 // pred_check_branch
          %153 = sbr.rel (%p151) target = $region24
        $region23: #{tpu_custom_call.1} parent=19 // pred_region
          %s154 = sand.u32 %s30, 1
          %s155 = scalar_lea.sflag [#allocation3], %s154
          %s156 = sand.u32 %s30, 1
          %s157 = smul.addr %s156, 256
          %s158 = scalar_lea.vmem [#allocation2], %s157
          %s159 = smul.u32 32, %s20
          %s161 = ssub.s32 4096, 4096
          %162 = vsyncadd %s155, %s161
          %s163 = smul.addr %s159, 128
          %s164 = scalar_lea.hbm %s0, %s163
          %s165 = sshll.u32 %s158, 4
          %s166 = int_to_ptr.vmem [resolvable:$true] %s165
          %171 = dma.hbm_to_vmem [thread:$0]  %s164, 4096, %s166, %s155, 128, 128, 8
        $region24: #{tpu_custom_call.1} parent=19 // pred_fallthru
          _
      $region20: #{tpu_custom_call.1} parent=5 // pred_fallthru
        _
      %p172 = scmp.le.s32.totalorder 1, %s20
      %p173 = scmp.lt.s32.totalorder %s20, 3
      %p174 = pnand %p172, %p173
      %p175 = pneg %p174
      // Predicated region
      $region25: #{tpu_custom_call.1} parent=5 // pred_check
        _
      $region26: #{tpu_custom_call.1} parent=5 // pred_check_branch
        %177 = sbr.rel (%p174) target = $region28
      $region27: #{tpu_custom_call.1} parent=5 // pred_region
        %s178 = ssub.s32 %s20, 1
        %s179 = sand.u32 %s33, 1
        %s180 = scalar_lea.sflag [#allocation3], %s179
        %s181 = sand.u32 %s33, 1
        %s182 = smul.addr %s181, 256
        %s183 = scalar_lea.vmem [#allocation2], %s182
        // Predicated region
        $region29: #{tpu_custom_call.1} parent=27 // pred_check
          %p184 = pneg %p46
        $region30: #{tpu_custom_call.1} parent=27 // pred_check_branch
          %186 = sbr.rel (%p184) target = $region32
        $region31: #{tpu_custom_call.1} parent=27 // pred_region
          %187 = dma.done %s180, 4096
        $region32: #{tpu_custom_call.1} parent=27 // pred_fallthru
          _
        // Predicated region
        $region33: #{tpu_custom_call.1} parent=27 // pred_check
          %p188 = pneg %p67
        $region34: #{tpu_custom_call.1} parent=27 // pred_check_branch
          %190 = sbr.rel (%p188) target = $region36
        $region35: #{tpu_custom_call.1} parent=27 // pred_region
          %191 = dma.done [#allocation6], 2048
        $region36: #{tpu_custom_call.1} parent=27 // pred_fallthru
          _
        %s192 = sand.u32 %s33, 1
        %s193 = scalar_lea.sflag [#allocation3], %s192
        %s194 = sand.u32 %s33, 1
        %s195 = smul.addr %s194, 256
        %s196 = scalar_lea.vmem [#allocation2], %s195
        %p197 = pneg %p46
        %p198 = pneg %p43
        %p199 = pneg %p67
        %p200 = pneg %p64
        %p201 = pneg %p93
        %p202 = pneg %p90
        %s203 = sand.u32 %s80, 1
        %s204 = scalar_lea.sflag [#allocation4], %s203
        %s205 = sand.u32 %s80, 1
        %s206 = smul.addr %s205, 256
        %s207 = scalar_lea.vmem [#allocation7], %s206
        %p208 = pneg %p119
        %p209 = pneg %p116
        %s210 = sand.u32 %s106, 1
        %s211 = scalar_lea.sflag [#allocation9], %s210
        %s212 = sand.u32 %s106, 1
        %s213 = smul.addr %s212, 2
        %s214 = scalar_lea.vmem [#allocation8], %s213
        %s215 = smul.u32 32, %s25
        %s216 = smul.u32 32, %s25
        %v217 = vld [vmem:[%s183] sm:$0xff]
        %v218 = vld [vmem:[%s183 + $0x8] sm:$0xff]
        %v219 = vld [vmem:[%s183 + $0x10] sm:$0xff]
        %v220 = vld [vmem:[%s183 + $0x18] sm:$0xff]
        %v221 = vld [vmem:[%s183 + $0x20] sm:$0xff]
        %v222 = vld [vmem:[%s183 + $0x28] sm:$0xff]
        %v223 = vld [vmem:[%s183 + $0x30] sm:$0xff]
        %v224 = vld [vmem:[%s183 + $0x38] sm:$0xff]
        %v225 = vld [vmem:[%s183 + $0x40] sm:$0xff]
        %v226 = vld [vmem:[%s183 + $0x48] sm:$0xff]
        %v227 = vld [vmem:[%s183 + $0x50] sm:$0xff]
        %v228 = vld [vmem:[%s183 + $0x58] sm:$0xff]
        %v229 = vld [vmem:[%s183 + $0x60] sm:$0xff]
        %v230 = vld [vmem:[%s183 + $0x68] sm:$0xff]
        %v231 = vld [vmem:[%s183 + $0x70] sm:$0xff]
        %v232 = vld [vmem:[%s183 + $0x78] sm:$0xff]
        %v233 = vld [vmem:[%s183 + $0x80] sm:$0xff]
        %v234 = vld [vmem:[%s183 + $0x88] sm:$0xff]
        %v235 = vld [vmem:[%s183 + $0x90] sm:$0xff]
        %v236 = vld [vmem:[%s183 + $0x98] sm:$0xff]
        %v237 = vld [vmem:[%s183 + $0xa0] sm:$0xff]
        %v238 = vld [vmem:[%s183 + $0xa8] sm:$0xff]
        %v239 = vld [vmem:[%s183 + $0xb0] sm:$0xff]
        %v240 = vld [vmem:[%s183 + $0xb8] sm:$0xff]
        %v241 = vld [vmem:[%s183 + $0xc0] sm:$0xff]
        %v242 = vld [vmem:[%s183 + $0xc8] sm:$0xff]
        %v243 = vld [vmem:[%s183 + $0xd0] sm:$0xff]
        %v244 = vld [vmem:[%s183 + $0xd8] sm:$0xff]
        %v245 = vld [vmem:[%s183 + $0xe0] sm:$0xff]
        %v246 = vld [vmem:[%s183 + $0xe8] sm:$0xff]
        %v247 = vld [vmem:[%s183 + $0xf0] sm:$0xff]
        %v248 = vld [vmem:[%s183 + $0xf8] sm:$0xff]
        %v249 = vld [vmem:[#allocation5] sm:$0xff]
        %v250 = vld [vmem:[#allocation5 + $0x8] sm:$0xff]
        %v251 = vld [vmem:[#allocation5 + $0x10] sm:$0xff]
        %v252 = vld [vmem:[#allocation5 + $0x18] sm:$0xff]
        %v253 = vld [vmem:[#allocation5 + $0x20] sm:$0xff]
        %v254 = vld [vmem:[#allocation5 + $0x28] sm:$0xff]
        %v255 = vld [vmem:[#allocation5 + $0x30] sm:$0xff]
        %v256 = vld [vmem:[#allocation5 + $0x38] sm:$0xff]
        %v257 = vld [vmem:[#allocation5 + $0x40] sm:$0xff]
        %v258 = vld [vmem:[#allocation5 + $0x48] sm:$0xff]
        %v259 = vld [vmem:[#allocation5 + $0x50] sm:$0xff]
        %v260 = vld [vmem:[#allocation5 + $0x58] sm:$0xff]
        %v261 = vld [vmem:[#allocation5 + $0x60] sm:$0xff]
        %v262 = vld [vmem:[#allocation5 + $0x68] sm:$0xff]
        %v263 = vld [vmem:[#allocation5 + $0x70] sm:$0xff]
        %v264 = vld [vmem:[#allocation5 + $0x78] sm:$0xff]
        %265 = vmatprep.subr.mxu0 0.0
        %266 = vmatpush1.msra.mxu0 %v249
        %267 = vmatprep.subr.mxu0 0.0
        %268 = vmatpush1.msra.mxu0 %v250
        %269 = vmatprep.subr.mxu0 0.0
        %270 = vmatpush1.msra.mxu0 %v251
        %271 = vmatprep.subr.mxu0 0.0
        %272 = vmatpush1.msra.mxu0 %v252
        %273 = vmatprep.subr.mxu0 0.0
        %274 = vmatpush1.msra.mxu0 %v253
        %275 = vmatprep.subr.mxu0 0.0
        %276 = vmatpush1.msra.mxu0 %v254
        %277 = vmatprep.subr.mxu0 0.0
        %278 = vmatpush1.msra.mxu0 %v255
        %279 = vmatprep.subr.mxu0 0.0
        %280 = vmatpush1.msra.mxu0 %v256
        %281 = vmatprep.subr.mxu0 0.0
        %282 = vmatpush1.msra.mxu0 %v257
        %283 = vmatprep.subr.mxu0 0.0
        %284 = vmatpush1.msra.mxu0 %v258
        %285 = vmatprep.subr.mxu0 0.0
        %286 = vmatpush1.msra.mxu0 %v259
        %287 = vmatprep.subr.mxu0 0.0
        %288 = vmatpush1.msra.mxu0 %v260
        %289 = vmatprep.subr.mxu0 0.0
        %290 = vmatpush1.msra.mxu0 %v261
        %291 = vmatprep.subr.mxu0 0.0
        %292 = vmatpush1.msra.mxu0 %v262
        %293 = vmatprep.subr.mxu0 0.0
        %294 = vmatpush1.msra.mxu0 %v263
        %295 = vmatprep.subr.mxu0 0.0
        %296 = vmatpush1.msra.mxu0 %v264
        %297 = vmatprep.subr.mxu0 0.0
        %298 = vmatpush1.msra.mxu0 0.0
        %299 = vmatprep.subr.mxu0 0.0
        %300 = vmatpush1.msra.mxu0 0.0
        %301 = vmatprep.subr.mxu0 0.0
        %302 = vmatpush1.msra.mxu0 0.0
        %303 = vmatprep.subr.mxu0 0.0
        %304 = vmatpush1.msra.mxu0 0.0
        %305 = vmatprep.subr.mxu0 0.0
        %306 = vmatpush1.msra.mxu0 0.0
        %307 = vmatprep.subr.mxu0 0.0
        %308 = vmatpush1.msra.mxu0 0.0
        %309 = vmatprep.subr.mxu0 0.0
        %310 = vmatpush1.msra.mxu0 0.0
        %311 = vmatprep.subr.mxu0 0.0
        %312 = vmatpush1.msra.mxu0 0.0
        %313 = vmatprep.subr.mxu0 0.0
        %314 = vmatpush1.msra.mxu0 0.0
        %315 = vmatprep.subr.mxu0 0.0
        %316 = vmatpush1.msra.mxu0 0.0
        %317 = vmatprep.subr.mxu0 0.0
        %318 = vmatpush1.msra.mxu0 0.0
        %319 = vmatprep.subr.mxu0 0.0
        %320 = vmatpush1.msra.mxu0 0.0
        %321 = vmatprep.subr.mxu0 0.0
        %322 = vmatpush1.msra.mxu0 0.0
        %323 = vmatprep.subr.mxu0 0.0
        %324 = vmatpush1.msra.mxu0 0.0
        %325 = vmatprep.subr.mxu0 0.0
        %326 = vmatpush1.msra.mxu0 0.0
        %327 = vmatprep.subr.mxu0 0.0
        %328 = vmatpush1.msra.mxu0 0.0
        %329 = vmatprep.mubr.f32.mxu0 0.0
        %330 = vmatmul.mubr.f32.gmra.mrb[0].mxu0 %v217
        %v331 = vpop.f32.mrb[0].mxu0
        %v332 = vadd.f32 0.0, %v331
        %v333 = vpop.f32.mrb[0].mxu0
        %334 = vmatprep.mubr.f32.mxu0 0.0
        %335 = vmatmul.mubr.f32.gmra.mrb[0].mxu0 %v218
        %v336 = vpop.f32.mrb[0].mxu0
        %v337 = vadd.f32 0.0, %v336
        %v338 = vpop.f32.mrb[0].mxu0
        %339 = vmatprep.mubr.f32.mxu0 0.0
        %340 = vmatmul.mubr.f32.gmra.mrb[0].mxu0 %v219
        %v341 = vpop.f32.mrb[0].mxu0
        %v342 = vadd.f32 0.0, %v341
        %v343 = vpop.f32.mrb[0].mxu0
        %344 = vmatprep.mubr.f32.mxu0 0.0
        %345 = vmatmul.mubr.f32.gmra.mrb[0].mxu0 %v220
        %v346 = vpop.f32.mrb[0].mxu0
        %v347 = vadd.f32 0.0, %v346
        %v348 = vpop.f32.mrb[0].mxu0
        %349 = vmatprep.mubr.f32.mxu0 0.0
        %350 = vmatmul.mubr.f32.gmra.mrb[0].mxu0 %v221
        %v351 = vpop.f32.mrb[0].mxu0
        %v352 = vadd.f32 0.0, %v351
        %v353 = vpop.f32.mrb[0].mxu0
        %354 = vmatprep.mubr.f32.mxu0 0.0
        %355 = vmatmul.mubr.f32.gmra.mrb[0].mxu0 %v222
        %v356 = vpop.f32.mrb[0].mxu0
        %v357 = vadd.f32 0.0, %v356
        %v358 = vpop.f32.mrb[0].mxu0
        %359 = vmatprep.mubr.f32.mxu0 0.0
        %360 = vmatmul.mubr.f32.gmra.mrb[0].mxu0 %v223
        %v361 = vpop.f32.mrb[0].mxu0
        %v362 = vadd.f32 0.0, %v361
        %v363 = vpop.f32.mrb[0].mxu0
        %364 = vmatprep.mubr.f32.mxu0 0.0
        %365 = vmatmul.mubr.f32.gmra.mrb[0].mxu0 %v224
        %v366 = vpop.f32.mrb[0].mxu0
        %v367 = vadd.f32 0.0, %v366
        %v368 = vpop.f32.mrb[0].mxu0
        %369 = vmatprep.mubr.f32.mxu0 0.0
        %370 = vmatmul.mubr.f32.gmra.mrb[0].mxu0 %v225
        %v371 = vpop.f32.mrb[0].mxu0
        %v372 = vadd.f32 0.0, %v371
        %v373 = vpop.f32.mrb[0].mxu0
        %374 = vmatprep.mubr.f32.mxu0 0.0
        %375 = vmatmul.mubr.f32.gmra.mrb[0].mxu0 %v226
        %v376 = vpop.f32.mrb[0].mxu0
        %v377 = vadd.f32 0.0, %v376
        %v378 = vpop.f32.mrb[0].mxu0
        %379 = vmatprep.mubr.f32.mxu0 0.0
        %380 = vmatmul.mubr.f32.gmra.mrb[0].mxu0 %v227
        %v381 = vpop.f32.mrb[0].mxu0
        %v382 = vadd.f32 0.0, %v381
        %v383 = vpop.f32.mrb[0].mxu0
        %384 = vmatprep.mubr.f32.mxu0 0.0
        %385 = vmatmul.mubr.f32.gmra.mrb[0].mxu0 %v228
        %v386 = vpop.f32.mrb[0].mxu0
        %v387 = vadd.f32 0.0, %v386
        %v388 = vpop.f32.mrb[0].mxu0
        %389 = vmatprep.mubr.f32.mxu0 0.0
        %390 = vmatmul.mubr.f32.gmra.mrb[0].mxu0 %v229
        %v391 = vpop.f32.mrb[0].mxu0
        %v392 = vadd.f32 0.0, %v391
        %v393 = vpop.f32.mrb[0].mxu0
        %394 = vmatprep.mubr.f32.mxu0 0.0
        %395 = vmatmul.mubr.f32.gmra.mrb[0].mxu0 %v230
        %v396 = vpop.f32.mrb[0].mxu0
        %v397 = vadd.f32 0.0, %v396
        %v398 = vpop.f32.mrb[0].mxu0
        %399 = vmatprep.mubr.f32.mxu0 0.0
        %400 = vmatmul.mubr.f32.gmra.mrb[0].mxu0 %v231
        %v401 = vpop.f32.mrb[0].mxu0
        %v402 = vadd.f32 0.0, %v401
        %v403 = vpop.f32.mrb[0].mxu0
        %404 = vmatprep.mubr.f32.mxu0 0.0
        %405 = vmatmul.mubr.f32.gmra.mrb[0].mxu0 %v232
        %v406 = vpop.f32.mrb[0].mxu0
        %v407 = vadd.f32 0.0, %v406
        %v408 = vpop.f32.mrb[0].mxu0
        %409 = vmatprep.mubr.f32.mxu0 0.0
        %410 = vmatmul.mubr.f32.gmra.mrb[0].mxu0 %v233
        %v411 = vpop.f32.mrb[0].mxu0
        %v412 = vadd.f32 0.0, %v411
        %v413 = vpop.f32.mrb[0].mxu0
        %414 = vmatprep.mubr.f32.mxu0 0.0
        %415 = vmatmul.mubr.f32.gmra.mrb[0].mxu0 %v234
        %v416 = vpop.f32.mrb[0].mxu0
        %v417 = vadd.f32 0.0, %v416
        %v418 = vpop.f32.mrb[0].mxu0
        %419 = vmatprep.mubr.f32.mxu0 0.0
        %420 = vmatmul.mubr.f32.gmra.mrb[0].mxu0 %v235
        %v421 = vpop.f32.mrb[0].mxu0
        %v422 = vadd.f32 0.0, %v421
        %v423 = vpop.f32.mrb[0].mxu0
        %424 = vmatprep.mubr.f32.mxu0 0.0
        %425 = vmatmul.mubr.f32.gmra.mrb[0].mxu0 %v236
        %v426 = vpop.f32.mrb[0].mxu0
        %v427 = vadd.f32 0.0, %v426
        %v428 = vpop.f32.mrb[0].mxu0
        %429 = vmatprep.mubr.f32.mxu0 0.0
        %430 = vmatmul.mubr.f32.gmra.mrb[0].mxu0 %v237
        %v431 = vpop.f32.mrb[0].mxu0
        %v432 = vadd.f32 0.0, %v431
        %v433 = vpop.f32.mrb[0].mxu0
        %434 = vmatprep.mubr.f32.mxu0 0.0
        %435 = vmatmul.mubr.f32.gmra.mrb[0].mxu0 %v238
        %v436 = vpop.f32.mrb[0].mxu0
        %v437 = vadd.f32 0.0, %v436
        %v438 = vpop.f32.mrb[0].mxu0
        %439 = vmatprep.mubr.f32.mxu0 0.0
        %440 = vmatmul.mubr.f32.gmra.mrb[0].mxu0 %v239
        %v441 = vpop.f32.mrb[0].mxu0
        %v442 = vadd.f32 0.0, %v441
        %v443 = vpop.f32.mrb[0].mxu0
        %444 = vmatprep.mubr.f32.mxu0 0.0
        %445 = vmatmul.mubr.f32.gmra.mrb[0].mxu0 %v240
        %v446 = vpop.f32.mrb[0].mxu0
        %v447 = vadd.f32 0.0, %v446
        %v448 = vpop.f32.mrb[0].mxu0
        %449 = vmatprep.mubr.f32.mxu0 0.0
        %450 = vmatmul.mubr.f32.gmra.mrb[0].mxu0 %v241
        %v451 = vpop.f32.mrb[0].mxu0
        %v452 = vadd.f32 0.0, %v451
        %v453 = vpop.f32.mrb[0].mxu0
        %454 = vmatprep.mubr.f32.mxu0 0.0
        %455 = vmatmul.mubr.f32.gmra.mrb[0].mxu0 %v242
        %v456 = vpop.f32.mrb[0].mxu0
        %v457 = vadd.f32 0.0, %v456
        %v458 = vpop.f32.mrb[0].mxu0
        %459 = vmatprep.mubr.f32.mxu0 0.0
        %460 = vmatmul.mubr.f32.gmra.mrb[0].mxu0 %v243
        %v461 = vpop.f32.mrb[0].mxu0
        %v462 = vadd.f32 0.0, %v461
        %v463 = vpop.f32.mrb[0].mxu0
        %464 = vmatprep.mubr.f32.mxu0 0.0
        %465 = vmatmul.mubr.f32.gmra.mrb[0].mxu0 %v244
        %v466 = vpop.f32.mrb[0].mxu0
        %v467 = vadd.f32 0.0, %v466
        %v468 = vpop.f32.mrb[0].mxu0
        %469 = vmatprep.mubr.f32.mxu0 0.0
        %470 = vmatmul.mubr.f32.gmra.mrb[0].mxu0 %v245
        %v471 = vpop.f32.mrb[0].mxu0
        %v472 = vadd.f32 0.0, %v471
        %v473 = vpop.f32.mrb[0].mxu0
        %474 = vmatprep.mubr.f32.mxu0 0.0
        %475 = vmatmul.mubr.f32.gmra.mrb[0].mxu0 %v246
        %v476 = vpop.f32.mrb[0].mxu0
        %v477 = vadd.f32 0.0, %v476
        %v478 = vpop.f32.mrb[0].mxu0
        %479 = vmatprep.mubr.f32.mxu0 0.0
        %480 = vmatmul.mubr.f32.gmra.mrb[0].mxu0 %v247
        %v481 = vpop.f32.mrb[0].mxu0
        %v482 = vadd.f32 0.0, %v481
        %v483 = vpop.f32.mrb[0].mxu0
        %484 = vmatprep.mubr.f32.mxu0 0.0
        %485 = vmatmul.mubr.f32.gmra.mrb[0].mxu0 %v248
        %v486 = vpop.f32.mrb[0].mxu0
        %v487 = vadd.f32 0.0, %v486
        %v488 = vpop.f32.mrb[0].mxu0
        %489 = vdwg.mxu0
        %490 = vst [vmem:[%s207] sm:$0xff] %v332
        %491 = vst [vmem:[%s207 + $0x8] sm:$0xff] %v337
        %492 = vst [vmem:[%s207 + $0x10] sm:$0xff] %v342
        %493 = vst [vmem:[%s207 + $0x18] sm:$0xff] %v347
        %494 = vst [vmem:[%s207 + $0x20] sm:$0xff] %v352
        %495 = vst [vmem:[%s207 + $0x28] sm:$0xff] %v357
        %496 = vst [vmem:[%s207 + $0x30] sm:$0xff] %v362
        %497 = vst [vmem:[%s207 + $0x38] sm:$0xff] %v367
        %498 = vst [vmem:[%s207 + $0x40] sm:$0xff] %v372
        %499 = vst [vmem:[%s207 + $0x48] sm:$0xff] %v377
        %500 = vst [vmem:[%s207 + $0x50] sm:$0xff] %v382
        %501 = vst [vmem:[%s207 + $0x58] sm:$0xff] %v387
        %502 = vst [vmem:[%s207 + $0x60] sm:$0xff] %v392
        %503 = vst [vmem:[%s207 + $0x68] sm:$0xff] %v397
        %504 = vst [vmem:[%s207 + $0x70] sm:$0xff] %v402
        %505 = vst [vmem:[%s207 + $0x78] sm:$0xff] %v407
        %506 = vst [vmem:[%s207 + $0x80] sm:$0xff] %v412
        %507 = vst [vmem:[%s207 + $0x88] sm:$0xff] %v417
        %508 = vst [vmem:[%s207 + $0x90] sm:$0xff] %v422
        %509 = vst [vmem:[%s207 + $0x98] sm:$0xff] %v427
        %510 = vst [vmem:[%s207 + $0xa0] sm:$0xff] %v432
        %511 = vst [vmem:[%s207 + $0xa8] sm:$0xff] %v437
        %512 = vst [vmem:[%s207 + $0xb0] sm:$0xff] %v442
        %513 = vst [vmem:[%s207 + $0xb8] sm:$0xff] %v447
        %514 = vst [vmem:[%s207 + $0xc0] sm:$0xff] %v452
        %515 = vst [vmem:[%s207 + $0xc8] sm:$0xff] %v457
        %516 = vst [vmem:[%s207 + $0xd0] sm:$0xff] %v462
        %517 = vst [vmem:[%s207 + $0xd8] sm:$0xff] %v467
        %518 = vst [vmem:[%s207 + $0xe0] sm:$0xff] %v472
        %519 = vst [vmem:[%s207 + $0xe8] sm:$0xff] %v477
        %520 = vst [vmem:[%s207 + $0xf0] sm:$0xff] %v482
        %521 = vst [vmem:[%s207 + $0xf8] sm:$0xff] %v487
        %v522 = vadd.f32 %v332, %v337
        %v523 = vadd.f32 %v522, %v342
        %v524 = vadd.f32 %v523, %v347
        %v525 = vadd.f32 %v524, %v352
        %v526 = vadd.f32 %v525, %v357
        %v527 = vadd.f32 %v526, %v362
        %v528 = vadd.f32 %v527, %v367
        %v529 = vadd.f32 %v528, %v372
        %v530 = vadd.f32 %v529, %v377
        %v531 = vadd.f32 %v530, %v382
        %v532 = vadd.f32 %v531, %v387
        %v533 = vadd.f32 %v532, %v392
        %v534 = vadd.f32 %v533, %v397
        %v535 = vadd.f32 %v534, %v402
        %v536 = vadd.f32 %v535, %v407
        %v537 = vadd.f32 %v536, %v412
        %v538 = vadd.f32 %v537, %v417
        %v539 = vadd.f32 %v538, %v422
        %v540 = vadd.f32 %v539, %v427
        %v541 = vadd.f32 %v540, %v432
        %v542 = vadd.f32 %v541, %v437
        %v543 = vadd.f32 %v542, %v442
        %v544 = vadd.f32 %v543, %v447
        %v545 = vadd.f32 %v544, %v452
        %v546 = vadd.f32 %v545, %v457
        %v547 = vadd.f32 %v546, %v462
        %v548 = vadd.f32 %v547, %v467
        %v549 = vadd.f32 %v548, %v472
        %v550 = vadd.f32 %v549, %v477
        %v551 = vadd.f32 %v550, %v482
        %v552 = vadd.f32 %v551, %v487
        %v553 = vrot.slane %v552, 4
        %v554 = vadd.f32 %v552, %v553
        %v555 = vrot.slane %v554, 2
        %v556 = vadd.f32 %v554, %v555
        %v557 = vrot.slane %v556, 1
        %v558 = vadd.f32 %v556, %v557
        %v559 = vmul.f32 %v332, %v332
        %v560 = vmul.f32 %v337, %v337
        %v561 = vmul.f32 %v342, %v342
        %v562 = vmul.f32 %v347, %v347
        %v563 = vmul.f32 %v352, %v352
        %v564 = vmul.f32 %v357, %v357
        %v565 = vmul.f32 %v362, %v362
        %v566 = vmul.f32 %v367, %v367
        %v567 = vmul.f32 %v372, %v372
        %v568 = vmul.f32 %v377, %v377
        %v569 = vmul.f32 %v382, %v382
        %v570 = vmul.f32 %v387, %v387
        %v571 = vmul.f32 %v392, %v392
        %v572 = vmul.f32 %v397, %v397
        %v573 = vmul.f32 %v402, %v402
        %v574 = vmul.f32 %v407, %v407
        %v575 = vmul.f32 %v412, %v412
        %v576 = vmul.f32 %v417, %v417
        %v577 = vmul.f32 %v422, %v422
        %v578 = vmul.f32 %v427, %v427
        %v579 = vmul.f32 %v432, %v432
        %v580 = vmul.f32 %v437, %v437
        %v581 = vmul.f32 %v442, %v442
        %v582 = vmul.f32 %v447, %v447
        %v583 = vmul.f32 %v452, %v452
        %v584 = vmul.f32 %v457, %v457
        %v585 = vmul.f32 %v462, %v462
        %v586 = vmul.f32 %v467, %v467
        %v587 = vmul.f32 %v472, %v472
        %v588 = vmul.f32 %v477, %v477
        %v589 = vmul.f32 %v482, %v482
        %v590 = vmul.f32 %v487, %v487
        %v591 = vadd.f32 %v559, %v560
        %v592 = vadd.f32 %v591, %v561
        %v593 = vadd.f32 %v592, %v562
        %v594 = vadd.f32 %v593, %v563
        %v595 = vadd.f32 %v594, %v564
        %v596 = vadd.f32 %v595, %v565
        %v597 = vadd.f32 %v596, %v566
        %v598 = vadd.f32 %v597, %v567
        %v599 = vadd.f32 %v598, %v568
        %v600 = vadd.f32 %v599, %v569
        %v601 = vadd.f32 %v600, %v570
        %v602 = vadd.f32 %v601, %v571
        %v603 = vadd.f32 %v602, %v572
        %v604 = vadd.f32 %v603, %v573
        %v605 = vadd.f32 %v604, %v574
        %v606 = vadd.f32 %v605, %v575
        %v607 = vadd.f32 %v606, %v576
        %v608 = vadd.f32 %v607, %v577
        %v609 = vadd.f32 %v608, %v578
        %v610 = vadd.f32 %v609, %v579
        %v611 = vadd.f32 %v610, %v580
        %v612 = vadd.f32 %v611, %v581
        %v613 = vadd.f32 %v612, %v582
        %v614 = vadd.f32 %v613, %v583
        %v615 = vadd.f32 %v614, %v584
        %v616 = vadd.f32 %v615, %v585
        %v617 = vadd.f32 %v616, %v586
        %v618 = vadd.f32 %v617, %v587
        %v619 = vadd.f32 %v618, %v588
        %v620 = vadd.f32 %v619, %v589
        %v621 = vadd.f32 %v620, %v590
        %v622 = vrot.slane %v621, 4
        %v623 = vadd.f32 %v621, %v622
        %v624 = vrot.slane %v623, 2
        %v625 = vadd.f32 %v623, %v624
        %v626 = vrot.slane %v625, 1
        %v627 = vadd.f32 %v625, %v626
        %vm628 = vcmask 1040384
        %v629 = vsel %vm628, %v558, %v627
        %630 = vst [vmem:[%s214] sm:$0x3] %v629
        %s631 = sand.u32 %s80, 1
        %s632 = scalar_lea.sflag [#allocation4], %s631
        %s633 = sand.u32 %s80, 1
        %s634 = smul.addr %s633, 256
        %s635 = scalar_lea.vmem [#allocation7], %s634
        %s636 = sand.u32 %s106, 1
        %s637 = scalar_lea.sflag [#allocation9], %s636
        %s638 = sand.u32 %s106, 1
        %s639 = smul.addr %s638, 2
        %s640 = scalar_lea.vmem [#allocation8], %s639
        // Predicated region
        $region37: #{tpu_custom_call.1} parent=27 // pred_check
          %p641 = pneg %p90
        $region38: #{tpu_custom_call.1} parent=27 // pred_check_branch
          %643 = sbr.rel (%p641) target = $region40
        $region39: #{tpu_custom_call.1} parent=27 // pred_region
          %s644 = smul.u32 32, %s25
          %s646 = ssub.s32 4096, 4096
          %647 = vsyncadd %s632, %s646
          %s648 = smul.addr %s644, 128
          %s649 = scalar_lea.hbm %s2, %s648
          %s650 = sshll.u32 %s635, 4
          %s651 = int_to_ptr.vmem [resolvable:$true] %s650
          %656 = dma.vmem_to_hbm [thread:$0]  %s651, 4096, %s649, %s632, 128, 128, 8
        $region40: #{tpu_custom_call.1} parent=27 // pred_fallthru
          _
        // Predicated region
        $region41: #{tpu_custom_call.1} parent=27 // pred_check
          %p657 = pneg %p116
        $region42: #{tpu_custom_call.1} parent=27 // pred_check_branch
          %659 = sbr.rel (%p657) target = $region44
        $region43: #{tpu_custom_call.1} parent=27 // pred_region
          %s661 = ssub.s32 32, 32
          %662 = vsyncadd %s637, %s661
          %s663 = smul.addr %s25, 32
          %s664 = scalar_lea.hbm %s3, %s663
          %s666 = sshll.u32 %s640, 4
          %s667 = int_to_ptr.vmem [resolvable:$true] %s666
          %669 = dma.vmem_to_hbm [thread:$0]  %s667, 32, %s664, %s637
        $region44: #{tpu_custom_call.1} parent=27 // pred_fallthru
          _
      $region28: #{tpu_custom_call.1} parent=5 // pred_fallthru
        _
      %p670 = scmp.le.s32.totalorder 2, %s20
      // Predicated region
      $region45: #{tpu_custom_call.1} parent=5 // pred_check
        %p671 = pneg %p670
      $region46: #{tpu_custom_call.1} parent=5 // pred_check_branch
        %673 = sbr.rel (%p671) target = $region48
      $region47: #{tpu_custom_call.1} parent=5 // pred_region
        %s674 = ssub.s32 %s20, 2
        // Predicated region
        $region49: #{tpu_custom_call.1} parent=47 // pred_check
          %p675 = pneg %p96
        $region50: #{tpu_custom_call.1} parent=47 // pred_check_branch
          %677 = sbr.rel (%p675) target = $region52
        $region51: #{tpu_custom_call.1} parent=47 // pred_region
          %s678 = sand.u32 %s81, 1
          %s679 = scalar_lea.sflag [#allocation4], %s678
          %s680 = sand.u32 %s81, 1
          %s681 = smul.addr %s680, 256
          %s682 = scalar_lea.vmem [#allocation7], %s681
          %683 = dma.done %s679, 4096
        $region52: #{tpu_custom_call.1} parent=47 // pred_fallthru
          _
        // Predicated region
        $region53: #{tpu_custom_call.1} parent=47 // pred_check
          %p684 = pneg %p122
        $region54: #{tpu_custom_call.1} parent=47 // pred_check_branch
          %686 = sbr.rel (%p684) target = $region56
        $region55: #{tpu_custom_call.1} parent=47 // pred_region
          %s687 = sand.u32 %s107, 1
          %s688 = scalar_lea.sflag [#allocation9], %s687
          %s689 = sand.u32 %s107, 1
          %s690 = smul.addr %s689, 2
          %s691 = scalar_lea.vmem [#allocation8], %s690
          %692 = dma.done %s688, 32
        $region56: #{tpu_custom_call.1} parent=47 // pred_fallthru
          _
      $region48: #{tpu_custom_call.1} parent=5 // pred_fallthru
        _
    $region6: #{tpu_custom_call.1} parent=1 // loop_footer
      %s24 = sadd.s32 1, %s20
    $region7: #{tpu_custom_call.1} parent=1 // loop_footer_branch
      %19 = sbr.rel target = $region3
    $region8: #{tpu_custom_call.1} parent=1 // loop_exit
      _
    %693 = vsyncpa [#allocation3], 1
    %s694 = scalar_lea.sflag [#allocation3], 1
    %695 = vsyncpa %s694, 1
    %696 = vsyncpa [#allocation6], 1
    %697 = vsyncpa [#allocation4], 1
    %s698 = scalar_lea.sflag [#allocation4], 1
    %699 = vsyncpa %s698, 1
    %700 = vsyncpa [#allocation9], 1
    %s701 = scalar_lea.sflag [#allocation9], 1
    %702 = vsyncpa %s701, 1

</llo_original>
